<compile_context>
chip_gen: v5e
topology: v5e:2x2
jax: 0.10.0
libtpu: 0.0.40
codegen_flags: <defaults>
</compile_context>

<pallas_src>
import jax
import jax.numpy as jnp
from jax.experimental import pallas as pl
from jax.experimental.pallas import tpu as pltpu


def _norm_kernel(x_ref, scale_ref, shift_ref, o_ref):
    # Fused multiply-add: (x - mean)/sigma  ==  x * (1/sigma) + (-mean/sigma).
    o_ref[...] = (x_ref[...] * scale_ref[...] + shift_ref[...]).astype(o_ref.dtype)


def _pick_block_rows(D):
    # Memory-bound: use the biggest tile that comfortably fits VMEM.
    # ~2 MiB per tile => ~8 MiB live (double-buffered in + out), safely under the
    # default scoped-VMEM limit on v5e (16 MiB) and v6e/v7x (32 MiB).
    target_bytes = 2 << 20
    rows = (target_bytes // (D * 4)) // 8 * 8
    return max(8, rows)


def normalize_pallas(x2d, scale_vec, shift_vec, *, block_rows=None):
    """x2d: [B, D] f32; scale_vec/shift_vec: [1, D] f32.  Returns [B, D] f32."""
    B, D = x2d.shape
    if block_rows is None:
        block_rows = _pick_block_rows(D)

    # Full-array block for small batches (exempt from the (8,128) rule);
    # otherwise tile rows in multiples of 8 and pad the batch up.
    tb = B if B <= block_rows else block_rows
    nb = pl.cdiv(B, tb)
    Bp = nb * tb
    if Bp != B:
        x2d = jnp.pad(x2d, ((0, Bp - B), (0, 0)))

    out = pl.pallas_call(
        _norm_kernel,
        out_shape=jax.ShapeDtypeStruct((Bp, D), jnp.float32),
        grid=(nb,),
        in_specs=[
            pl.BlockSpec((tb, D), lambda i: (i, 0)),   # activations: row tiles
            pl.BlockSpec((1, D), lambda i: (0, 0)),    # scale: VMEM-resident
            pl.BlockSpec((1, D), lambda i: (0, 0)),    # shift: VMEM-resident
        ],
        out_specs=pl.BlockSpec((tb, D), lambda i: (i, 0)),
        compiler_params=pltpu.CompilerParams(
            dimension_semantics=("parallel",),
        ),
    )(x2d, scale_vec, shift_vec)

    return out if Bp == B else out[:B]


class NormalizationPallas:
    """JAX/Pallas port of the PyTorch Normalization module (NCHW input)."""

    _STATS = {
        "mnist": ([0.1307], [0.3081]),
        "cifar10": ([0.4914, 0.4822, 0.4465], [0.2023, 0.1994, 0.201]),
    }

    def __init__(self, dataset):
        assert dataset in self._STATS, dataset
        mean_c = jnp.asarray(self._STATS[dataset][0], jnp.float32)
        sigma_c = jnp.asarray(self._STATS[dataset][1], jnp.float32)
        # Raw stats for the pure-JAX reference.
        self._mean = mean_c.reshape(1, -1, 1, 1)
        self._sigma = sigma_c.reshape(1, -1, 1, 1)
        # Precompute the folded affine params once (multiply instead of divide).
        self._scale_c = 1.0 / sigma_c          # [Cn]
        self._shift_c = -mean_c / sigma_c      # [Cn]
        self._vec_cache = {}

    def _vectors(self, C, H, W):
        key = (C, H, W)
        if key not in self._vec_cache:
            scale_c = self._scale_c
            shift_c = self._shift_c
            if scale_c.shape[0] == 1:          # mnist-style scalar -> broadcast to C
                scale_c = jnp.broadcast_to(scale_c, (C,))
                shift_c = jnp.broadcast_to(shift_c, (C,))
            assert scale_c.shape[0] == C, "channel count mismatch with dataset stats"
            hw = H * W
            # [1, C*H*W] rows, computed once per shape and cached (host-side glue).
            scale_vec = jnp.repeat(scale_c, hw).reshape(1, C * hw)
            shift_vec = jnp.repeat(shift_c, hw).reshape(1, C * hw)
            self._vec_cache[key] = (scale_vec, shift_vec)
        return self._vec_cache[key]

    def __call__(self, x_nchw):
        B, C, H, W = x_nchw.shape
        scale_vec, shift_vec = self._vectors(C, H, W)
        # Glue-side view as [B, C*H*W]: lane-dense last dim, no compute hoisted out.
        x2d = x_nchw.reshape(B, C * H * W).astype(jnp.float32)
        y2d = normalize_pallas(x2d, scale_vec, shift_vec)
        return y2d.reshape(B, C, H, W)

    def reference(self, x_nchw):
        # Pure-JAX reference matching the PyTorch forward exactly.
        return (x_nchw.astype(jnp.float32) - self._mean) / self._sigma


if __name__ == "__main__":
    key = jax.random.PRNGKey(0)
    k1, k2, k3 = jax.random.split(key, 3)

    # cifar10-style: 3 channels, 16x16 spatial -> D = 768 (lane-dense, 6*128).
    x_cifar = jax.random.uniform(k1, (2, 3, 16, 16), jnp.float32)
    norm_cifar = NormalizationPallas("cifar10")
    out_cifar = jax.block_until_ready(norm_cifar(x_cifar))
    ref_cifar = norm_cifar.reference(x_cifar)
    assert out_cifar.shape == x_cifar.shape
    assert jnp.allclose(out_cifar, ref_cifar, atol=1e-5, rtol=1e-5), "cifar10 mismatch"

    # mnist-style: 1 channel, 16x16 spatial -> D = 256 (2*128).
    x_mnist = jax.random.uniform(k2, (2, 1, 16, 16), jnp.float32)
    norm_mnist = NormalizationPallas("mnist")
    out_mnist = jax.block_until_ready(norm_mnist(x_mnist))
    ref_mnist = norm_mnist.reference(x_mnist)
    assert out_mnist.shape == x_mnist.shape
    assert jnp.allclose(out_mnist, ref_mnist, atol=1e-5, rtol=1e-5), "mnist mismatch"

    # Exercise the row-tiled (multi-block, padded-batch) path explicitly.
    B, D = 34, 768     # 34 rows, block_rows=8 -> grid=(5,), padded to 40 rows
    x_big = jax.random.uniform(k3, (B, D), jnp.float32)
    scale_vec, shift_vec = norm_cifar._vectors(3, 16, 16)
    out_big = jax.block_until_ready(
        normalize_pallas(x_big, scale_vec, shift_vec, block_rows=8))
    ref_big = x_big * scale_vec + shift_vec
    assert out_big.shape == (B, D)
    assert jnp.allclose(out_big, ref_big, atol=1e-5, rtol=1e-5), "tiled-path mismatch"

    print("KERNEL_OK")
</pallas_src>

<mosaic_0001>
module attributes {stable_mosaic.version = 11 : i64} {
  func.func @_norm_kernel(%arg0: i32, %arg1: memref<2x768xf32, #tpu.memory_space<vmem>>, %arg2: memref<1x768xf32, #tpu.memory_space<vmem>>, %arg3: memref<1x768xf32, #tpu.memory_space<vmem>>, %arg4: memref<2x768xf32, #tpu.memory_space<vmem>>) attributes {dimension_semantics = [#tpu.dimension_semantics<parallel>], iteration_bounds = array<i64: 1>, scalar_prefetch = 0 : i64, scratch_operands = 0 : i64, tpu.core_type = #tpu.core_type<tc>, window_params = [{transform_indices = @transform_0, window_bounds = array<i64: 2, 768>}, {pipeline_mode = #tpu.pipeline_mode<synchronous>, transform_indices = @transform_1, window_bounds = array<i64: 1, 768>}, {pipeline_mode = #tpu.pipeline_mode<synchronous>, transform_indices = @transform_2, window_bounds = array<i64: 1, 768>}, {transform_indices = @transform_3, window_bounds = array<i64: 2, 768>}]} {
    %c0 = arith.constant 0 : index
    %c0_0 = arith.constant 0 : index
    %0 = vector.load %arg1[%c0, %c0_0] : memref<2x768xf32, #tpu.memory_space<vmem>>, vector<2x768xf32>
    %c0_1 = arith.constant 0 : index
    %c0_2 = arith.constant 0 : index
    %1 = vector.load %arg2[%c0_1, %c0_2] : memref<1x768xf32, #tpu.memory_space<vmem>>, vector<1x768xf32>
    %2 = vector.broadcast %1 : vector<1x768xf32> to vector<2x768xf32>
    %3 = arith.mulf %0, %2 : vector<2x768xf32>
    %c0_3 = arith.constant 0 : index
    %c0_4 = arith.constant 0 : index
    %4 = vector.load %arg3[%c0_3, %c0_4] : memref<1x768xf32, #tpu.memory_space<vmem>>, vector<1x768xf32>
    %5 = vector.broadcast %4 : vector<1x768xf32> to vector<2x768xf32>
    %6 = arith.addf %3, %5 : vector<2x768xf32>
    %c0_5 = arith.constant 0 : index
    %c0_6 = arith.constant 0 : index
    %7 = vector.load %arg4[%c0_5, %c0_6] : memref<2x768xf32, #tpu.memory_space<vmem>>, vector<2x768xf32>
    tpu.vector_store %arg4[%c0_5, %c0_6], %6 {strides = array<i32>} : memref<2x768xf32, #tpu.memory_space<vmem>>, vector<2x768xf32>,
    return
  }
  func.func @transform_0(%arg0: i32) -> (i32, i32) {
    %c0_i32 = arith.constant 0 : i32
    %c0_i32_0 = arith.constant 0 : i32
    return %arg0, %c0_i32 : i32, i32
  }
  func.func @transform_1(%arg0: i32) -> (i32, i32) {
    %c0_i32 = arith.constant 0 : i32
    %c0_i32_0 = arith.constant 0 : i32
    %c0_i32_1 = arith.constant 0 : i32
    return %c0_i32, %c0_i32_0 : i32, i32
  }
  func.func @transform_2(%arg0: i32) -> (i32, i32) {
    %c0_i32 = arith.constant 0 : i32
    %c0_i32_0 = arith.constant 0 : i32
    %c0_i32_1 = arith.constant 0 : i32
    return %c0_i32, %c0_i32_0 : i32, i32
  }
  func.func @transform_3(%arg0: i32) -> (i32, i32) {
    %c0_i32 = arith.constant 0 : i32
    %c0_i32_0 = arith.constant 0 : i32
    return %arg0, %c0_i32 : i32, i32
  }
}

</mosaic_0001>

<llo_original>
// kernel: tpu_custom_call.1
$region0: #{tpu_custom_call.1}
  #allocation0 [shape = 'u32[]', space=smem, size = 0x4, offset = 0x4, fixed_abs, tag = 'smem constant byte address 0x4 - core index']
  #allocation1 [shape = 'u32[72,128]{1,0:T(1,128)}', space=vmem, size = 0x9000, scoped, tag = 'internal scratch']
  %s0 = inlined_call_operand.hbm [shape: f32[2,768], index: 0, kind: input, shape index: {}]
  %s1 = inlined_call_operand.hbm [shape: f32[1,768], index: 1, kind: input, shape index: {}]
  %s2 = inlined_call_operand.hbm [shape: f32[1,768], index: 2, kind: input, shape index: {}]
  %s3 = inlined_call_operand.hbm [shape: f32[2,768], index: 3, kind: output, shape index: {}]
  %s4 = sld [smem:[#allocation0]]
  $region34: #{tpu_custom_call.1} parent=0
    _
  %s6 = ssub.s32 1, %s4
  %s7 = scalar_select 0, %s6, %s4
  $region1: #{tpu_custom_call.1} parent=0
    #allocation2 [shape = 'u8[6144]{0}', space=vmem, size = 0x1800, scoped, tag = 'input window, operand 0, single buffered']
    #allocation3 [shape = 's32[1]{0}', space=sflag, size = 0x4, scoped, tag = 'scoped memory for tpu_custom_call.1']
    #allocation4 [shape = 's32[1]{0}', space=sflag, size = 0x4, scoped, tag = 'scoped memory for tpu_custom_call.1']
    #allocation5 [shape = 'u8[3072]{0}', space=vmem, size = 0xc00, scoped, tag = 'input window, operand 1, single buffered']
    #allocation6 [shape = 's32[1]{0}', space=sflag, size = 0x4, scoped, tag = 'scoped memory for tpu_custom_call.1']
    #allocation7 [shape = 'u8[3072]{0}', space=vmem, size = 0xc00, scoped, tag = 'input window, operand 2, single buffered']
    #allocation8 [shape = 'u8[6144]{0}', space=vmem, size = 0x1800, scoped, tag = 'output window, operand 0, single buffered']
    %8 = vsyncpa [#allocation3], 0
    %9 = vsyncpa [#allocation6], 0
    %10 = vsyncpa [#allocation4], 0
    // Predicated region
    $region2: #{tpu_custom_call.1} parent=1 // pred_check
      _
    $region3: #{tpu_custom_call.1} parent=1 // pred_check_branch
      %12 = sbr.rel (0) target = $region5
    $region4: #{tpu_custom_call.1} parent=1 // pred_region
      %14 = vsyncadd [#allocation3], 0
      %s16 = sshll.u32 %s0, 4
      %s17 = int_to_ptr.hbm [resolvable:$true] %s16
      %s18 = sshll.u32 [#allocation2], 4
      %s19 = int_to_ptr.vmem [resolvable:$true] %s18
      %21 = dma.hbm_to_vmem [thread:$0]  %s17, 192, %s19, [#allocation3]
    $region5: #{tpu_custom_call.1} parent=1 // pred_fallthru
      _
    // Predicated region
    $region6: #{tpu_custom_call.1} parent=1 // pred_check
      _
    $region7: #{tpu_custom_call.1} parent=1 // pred_check_branch
      %23 = sbr.rel (0) target = $region9
    $region8: #{tpu_custom_call.1} parent=1 // pred_region
      %25 = vsyncadd [#allocation6], 0
      %s27 = sshll.u32 %s1, 4
      %s28 = int_to_ptr.hbm [resolvable:$true] %s27
      %s29 = sshll.u32 [#allocation5], 4
      %s30 = int_to_ptr.vmem [resolvable:$true] %s29
      %32 = dma.hbm_to_vmem [thread:$0]  %s28, 96, %s30, [#allocation6]
    $region9: #{tpu_custom_call.1} parent=1 // pred_fallthru
      _
    // Predicated region
    $region10: #{tpu_custom_call.1} parent=1 // pred_check
      _
    $region11: #{tpu_custom_call.1} parent=1 // pred_check_branch
      %34 = sbr.rel (0) target = $region13
    $region12: #{tpu_custom_call.1} parent=1 // pred_region
      %36 = vsyncadd [#allocation6], 0
      %s38 = sshll.u32 %s2, 4
      %s39 = int_to_ptr.hbm [resolvable:$true] %s38
      %s40 = sshll.u32 [#allocation7], 4
      %s41 = int_to_ptr.vmem [resolvable:$true] %s40
      %43 = dma.hbm_to_vmem [thread:$0]  %s39, 96, %s41, [#allocation6]
    $region13: #{tpu_custom_call.1} parent=1 // pred_fallthru
      _
    // Predicated region
    $region14: #{tpu_custom_call.1} parent=1 // pred_check
      _
    $region15: #{tpu_custom_call.1} parent=1 // pred_check_branch
      %45 = sbr.rel (0) target = $region17
    $region16: #{tpu_custom_call.1} parent=1 // pred_region
      %47 = dma.done [#allocation3], 192
    $region17: #{tpu_custom_call.1} parent=1 // pred_fallthru
      _
    // Predicated region
    $region18: #{tpu_custom_call.1} parent=1 // pred_check
      _
    $region19: #{tpu_custom_call.1} parent=1 // pred_check_branch
      %49 = sbr.rel (0) target = $region21
    $region20: #{tpu_custom_call.1} parent=1 // pred_region
      %51 = dma.done [#allocation6], 96
    $region21: #{tpu_custom_call.1} parent=1 // pred_fallthru
      _
    // Predicated region
    $region22: #{tpu_custom_call.1} parent=1 // pred_check
      _
    $region23: #{tpu_custom_call.1} parent=1 // pred_check_branch
      %53 = sbr.rel (0) target = $region25
    $region24: #{tpu_custom_call.1} parent=1 // pred_region
      %55 = dma.done [#allocation6], 96
    $region25: #{tpu_custom_call.1} parent=1 // pred_fallthru
      _
    %v56 = vld [vmem:[#allocation2] sm:$0xff]
    %v57 = vld [vmem:[#allocation2 + $0x8] sm:$0xf]
    %v58 = vld [vmem:[#allocation5] sm:$0x3f]
    %v60 = vperm.slane %v58, 0
    %v61 = vperm.slane %v58, 1
    %v62 = vperm.slane %v58, 2
    %v63 = vperm.slane %v58, 3
    %v64 = vperm.slane %v58, 4
    %v65 = vperm.slane %v58, 5
    %v66 = vrot.slane %v61, 6
    %v67 = vrot.slane %v62, 4
    %v68 = vrot.slane %v63, 2
    %v69 = vrot.slane %v65, 6
    %vm70 = vcmask 1041408
    %v71 = vsel %vm70, %v60, %v66
    %vm72 = vcmask 1045508
    %v73 = vsel %vm72, %v67, %v68
    %vm74 = vcmask 1043456
    %v75 = vsel %vm74, %v71, %v73
    %v76 = vsel %vm70, %v64, %v69
    %v79 = vmul.f32 %v56, %v75
    %v80 = vmul.f32 %v57, %v76
    %v81 = vld [vmem:[#allocation7] sm:$0x3f]
    %v83 = vperm.slane %v81, 0
    %v84 = vperm.slane %v81, 1
    %v85 = vperm.slane %v81, 2
    %v86 = vperm.slane %v81, 3
    %v87 = vperm.slane %v81, 4
    %v88 = vperm.slane %v81, 5
    %v89 = vrot.slane %v84, 6
    %v90 = vrot.slane %v85, 4
    %v91 = vrot.slane %v86, 2
    %v92 = vrot.slane %v88, 6
    %v93 = vsel %vm70, %v83, %v89
    %v94 = vsel %vm72, %v90, %v91
    %v95 = vsel %vm74, %v93, %v94
    %v96 = vsel %vm70, %v87, %v92
    %v99 = vadd.f32 %v79, %v95
    %v100 = vadd.f32 %v80, %v96
    %101 = vst [vmem:[#allocation8] sm:$0xff] %v99
    %102 = vst [vmem:[#allocation8 + $0x8] sm:$0xf] %v100
    // Predicated region
    $region26: #{tpu_custom_call.1} parent=1 // pred_check
      _
    $region27: #{tpu_custom_call.1} parent=1 // pred_check_branch
      %104 = sbr.rel (0) target = $region29
    $region28: #{tpu_custom_call.1} parent=1 // pred_region
      %106 = vsyncadd [#allocation4], 0
      %s108 = sshll.u32 [#allocation8], 4
      %s109 = int_to_ptr.vmem [resolvable:$true] %s108
      %s110 = sshll.u32 %s3, 4
      %s111 = int_to_ptr.hbm [resolvable:$true] %s110
      %113 = dma.vmem_to_hbm [thread:$0]  %s109, 192, %s111, [#allocation4]
    $region29: #{tpu_custom_call.1} parent=1 // pred_fallthru
      _
    // Predicated region
    $region30: #{tpu_custom_call.1} parent=1 // pred_check
      _
    $region31: #{tpu_custom_call.1} parent=1 // pred_check_branch
      %115 = sbr.rel (0) target = $region33
    $region32: #{tpu_custom_call.1} parent=1 // pred_region
      %117 = dma.done [#allocation4], 192
    $region33: #{tpu_custom_call.1} parent=1 // pred_fallthru
      _
    %118 = vsyncpa [#allocation3], 1
    %119 = vsyncpa [#allocation6], 1
    %120 = vsyncpa [#allocation4], 1

</llo_original>
